<compile_context>
chip_gen: v6e
topology: v6e:2x2x1
jax: 0.10.0
libtpu: 0.0.40
codegen_flags: <defaults>
</compile_context>

<pallas_src>
import functools

import jax
import jax.numpy as jnp
import numpy as np
from jax.experimental import pallas as pl
from jax.experimental.pallas import tpu as pltpu

LANE = 128      # f32 lane width
SUBLANE = 8     # f32 sublane height


def _round_up(x, m):
    return (x + m - 1) // m * m


# ------------------------------- kernel -------------------------------------
def _dm_encoder_kernel(x_ref, w_ref, b_ref, o_ref, *, padded_dims, num_layers):
    """Fused MLP:  h = x ; for l < L-1: h = relu(h @ W_l + b_l) ; out = h @ W_L + b_L.

    x_ref : (block_b, padded_dims[0])        padded input block
    w_ref : (L, Kmax, Nmax)                  zero-padded weight slab (resident)
    b_ref : (L, 1, Nmax)                     zero-padded bias slab   (resident)
    o_ref : (block_b, padded_dims[-1])       full 128-lane output slab
    """
    h = x_ref[...]  # (block_b, padded_dims[0]) f32
    for l in range(num_layers):
        k_pad = padded_dims[l]
        n_pad = padded_dims[l + 1]
        w = w_ref[l, :k_pad, :n_pad]          # static slice of resident slab
        b = b_ref[l, :, :n_pad]               # (1, n_pad)
        h = jnp.dot(h, w, preferred_element_type=jnp.float32) + b
        if l < num_layers - 1:
            h = jnp.maximum(h, 0.0)           # ReLU (hidden layers only)
    o_ref[...] = h.astype(o_ref.dtype)


# --------------------------- parameter packing -------------------------------
def make_dm_encoder_params(key, num_encoder_obs, encoder_hidden_dims):
    """List of (W (d_in, d_out), b (1, d_out)) f32 — synthetic deterministic init."""
    dims = [num_encoder_obs] + list(encoder_hidden_dims)
    keys = jax.random.split(key, len(dims) - 1)
    layers = []
    for l in range(len(dims) - 1):
        kw, kb = jax.random.split(keys[l])
        bound = 1.0 / float(np.sqrt(dims[l]))
        w = jax.random.uniform(kw, (dims[l], dims[l + 1]), jnp.float32, -bound, bound)
        b = jax.random.uniform(kb, (1, dims[l + 1]), jnp.float32, -bound, bound)
        layers.append((w, b))
    return layers


def pack_dm_encoder_params(layers):
    """Pack per-layer (W, b) into single 128-padded slabs kept resident in VMEM."""
    dims = [layers[0][0].shape[0]] + [w.shape[1] for (w, _) in layers]
    padded = tuple(_round_up(d, LANE) for d in dims)
    L = len(layers)
    k_max = max(padded[:-1])
    n_max = max(padded[1:])
    w_slab = np.zeros((L, k_max, n_max), np.float32)
    b_slab = np.zeros((L, 1, n_max), np.float32)
    for l, (w, b) in enumerate(layers):
        w_np = np.asarray(w, np.float32)
        b_np = np.asarray(b, np.float32).reshape(-1)
        w_slab[l, : w_np.shape[0], : w_np.shape[1]] = w_np
        b_slab[l, 0, : b_np.shape[0]] = b_np
    return {
        "w_slab": jnp.asarray(w_slab),
        "b_slab": jnp.asarray(b_slab),
        "dims": tuple(dims),
        "padded_dims": padded,
    }


# ------------------------------- forward -------------------------------------
def dm_encoder_forward(dm, packed, *, max_block_b=128):
    """dm: (B, num_encoder_obs) f32  ->  (B, encoder_hidden_dims[-1]) f32."""
    dims = packed["dims"]
    padded = packed["padded_dims"]
    num_layers = len(dims) - 1

    B, d_in = dm.shape
    assert d_in == dims[0], f"expected input dim {dims[0]}, got {d_in}"
    d_in_pad = padded[0]
    d_out = dims[-1]
    d_out_pad = padded[-1]

    # Batch block: multiple of the 8-row sublane, capped at max_block_b.
    block_b = min(max_block_b, _round_up(B, SUBLANE))
    b_pad = _round_up(B, block_b)

    # Zero-pad input (rows to the block multiple, features to 128 lanes).
    x = jnp.zeros((b_pad, d_in_pad), jnp.float32).at[:B, :d_in].set(dm)

    kernel = functools.partial(
        _dm_encoder_kernel, padded_dims=padded, num_layers=num_layers
    )

    out_padded = pl.pallas_call(
        kernel,
        grid=(b_pad // block_b,),
        in_specs=[
            # activations: blocked along batch, full padded feature width
            pl.BlockSpec((block_b, d_in_pad), lambda i: (i, 0)),
            # weight / bias slabs: resident across all grid steps
            pl.BlockSpec(packed["w_slab"].shape, lambda i: (0, 0, 0)),
            pl.BlockSpec(packed["b_slab"].shape, lambda i: (0, 0, 0)),
        ],
        out_specs=pl.BlockSpec((block_b, d_out_pad), lambda i: (i, 0)),
        out_shape=jax.ShapeDtypeStruct((b_pad, d_out_pad), jnp.float32),
        compiler_params=pltpu.CompilerParams(
            dimension_semantics=("parallel",),   # megacore-shardable on v7x
        ),
    )(x, packed["w_slab"], packed["b_slab"])

    return out_padded[:B, :d_out]


# ------------------------- pure-JAX reference --------------------------------
def _dm_encoder_ref(dm, layers):
    h = dm
    for l, (w, b) in enumerate(layers):
        h = h @ w + b
        if l < len(layers) - 1:
            h = jnp.maximum(h, 0.0)
    return h


# ---------------------------------- main --------------------------------------
if __name__ == "__main__":
    # Depth-map encoder: dm is "usually shape (187)"; hidden dims (64, 32, 6).
    B = 256
    num_encoder_obs = 187
    encoder_hidden_dims = (64, 32, 6)

    key = jax.random.PRNGKey(0)
    k_params, k_dm = jax.random.split(key)

    layers = make_dm_encoder_params(k_params, num_encoder_obs, encoder_hidden_dims)
    packed = pack_dm_encoder_params(layers)

    dm = jax.random.normal(k_dm, (B, num_encoder_obs), jnp.float32)

    out = jax.block_until_ready(dm_encoder_forward(dm, packed))

    # correctness check against pure-JAX reference
    out_ref = _dm_encoder_ref(dm, layers)
    assert out.shape == (B, encoder_hidden_dims[-1])
    assert jnp.allclose(out, out_ref, atol=1e-4, rtol=1e-4), (
        float(jnp.max(jnp.abs(out - out_ref)))
    )

    print("KERNEL_OK")
</pallas_src>

<mosaic_0001>
module attributes {stable_mosaic.version = 11 : i64} {
  func.func @_dm_encoder_kernel(%arg0: i32, %arg1: memref<128x256xf32, #tpu.memory_space<vmem>>, %arg2: memref<3x256x128xf32, #tpu.memory_space<vmem>>, %arg3: memref<3x1x128xf32, #tpu.memory_space<vmem>>, %arg4: memref<128x128xf32, #tpu.memory_space<vmem>>) attributes {dimension_semantics = [#tpu.dimension_semantics<parallel>], iteration_bounds = array<i64: 2>, scalar_prefetch = 0 : i64, scratch_operands = 0 : i64, tpu.core_type = #tpu.core_type<tc>, window_params = [{transform_indices = @transform_0, window_bounds = array<i64: 128, 256>}, {pipeline_mode = #tpu.pipeline_mode<synchronous>, transform_indices = @transform_1, window_bounds = array<i64: 3, 256, 128>}, {pipeline_mode = #tpu.pipeline_mode<synchronous>, transform_indices = @transform_2, window_bounds = array<i64: 3, 1, 128>}, {transform_indices = @transform_3, window_bounds = array<i64: 128, 128>}]} {
    %c0 = arith.constant 0 : index
    %c0_0 = arith.constant 0 : index
    %0 = vector.load %arg1[%c0, %c0_0] : memref<128x256xf32, #tpu.memory_space<vmem>>, vector<128x256xf32>
    %c0_1 = arith.constant 0 : index
    %c0_2 = arith.constant 0 : index
    %c0_3 = arith.constant 0 : index
    %1 = vector.load %arg2[%c0_1, %c0_2, %c0_3] : memref<3x256x128xf32, #tpu.memory_space<vmem>>, vector<1x256x128xf32>
    %2 = vector.shape_cast %1 : vector<1x256x128xf32> to vector<256x128xf32>
    %c0_4 = arith.constant 0 : index
    %c0_5 = arith.constant 0 : index
    %c0_6 = arith.constant 0 : index
    %3 = vector.load %arg3[%c0_4, %c0_5, %c0_6] : memref<3x1x128xf32, #tpu.memory_space<vmem>>, vector<1x1x128xf32>
    %4 = vector.shape_cast %3 : vector<1x1x128xf32> to vector<1x128xf32>
    %cst = arith.constant dense<0.000000e+00> : vector<128x128xf32>
    %5 = tpu.matmul %0, %2, %cst {dimension_numbers = #tpu.dot_dimension_numbers<[1], [0], [0], [1], [0, 0, 1, 1], [], []>} : vector<128x256xf32>, vector<256x128xf32>, vector<128x128xf32> -> vector<128x128xf32>
    %6 = vector.broadcast %4 : vector<1x128xf32> to vector<128x128xf32>
    %7 = arith.addf %5, %6 : vector<128x128xf32>
    %cst_7 = arith.constant 0.000000e+00 : f32
    %8 = vector.broadcast %cst_7 : f32 to vector<128x128xf32>
    %9 = arith.maximumf %7, %8 : vector<128x128xf32>
    %c1 = arith.constant 1 : index
    %c0_8 = arith.constant 0 : index
    %c0_9 = arith.constant 0 : index
    %10 = vector.load %arg2[%c1, %c0_8, %c0_9] : memref<3x256x128xf32, #tpu.memory_space<vmem>>, vector<1x128x128xf32>
    %11 = vector.shape_cast %10 : vector<1x128x128xf32> to vector<128x128xf32>
    %c1_10 = arith.constant 1 : index
    %c0_11 = arith.constant 0 : index
    %c0_12 = arith.constant 0 : index
    %12 = vector.load %arg3[%c1_10, %c0_11, %c0_12] : memref<3x1x128xf32, #tpu.memory_space<vmem>>, vector<1x1x128xf32>
    %13 = vector.shape_cast %12 : vector<1x1x128xf32> to vector<1x128xf32>
    %cst_13 = arith.constant dense<0.000000e+00> : vector<128x128xf32>
    %14 = tpu.matmul %9, %11, %cst_13 {dimension_numbers = #tpu.dot_dimension_numbers<[1], [0], [0], [1], [0, 0, 1, 1], [], []>} : vector<128x128xf32>, vector<128x128xf32>, vector<128x128xf32> -> vector<128x128xf32>
    %15 = vector.broadcast %13 : vector<1x128xf32> to vector<128x128xf32>
    %16 = arith.addf %14, %15 : vector<128x128xf32>
    %cst_14 = arith.constant 0.000000e+00 : f32
    %17 = vector.broadcast %cst_14 : f32 to vector<128x128xf32>
    %18 = arith.maximumf %16, %17 : vector<128x128xf32>
    %c2 = arith.constant 2 : index
    %c0_15 = arith.constant 0 : index
    %c0_16 = arith.constant 0 : index
    %19 = vector.load %arg2[%c2, %c0_15, %c0_16] : memref<3x256x128xf32, #tpu.memory_space<vmem>>, vector<1x128x128xf32>
    %20 = vector.shape_cast %19 : vector<1x128x128xf32> to vector<128x128xf32>
    %c2_17 = arith.constant 2 : index
    %c0_18 = arith.constant 0 : index
    %c0_19 = arith.constant 0 : index
    %21 = vector.load %arg3[%c2_17, %c0_18, %c0_19] : memref<3x1x128xf32, #tpu.memory_space<vmem>>, vector<1x1x128xf32>
    %22 = vector.shape_cast %21 : vector<1x1x128xf32> to vector<1x128xf32>
    %cst_20 = arith.constant dense<0.000000e+00> : vector<128x128xf32>
    %23 = tpu.matmul %18, %20, %cst_20 {dimension_numbers = #tpu.dot_dimension_numbers<[1], [0], [0], [1], [0, 0, 1, 1], [], []>} : vector<128x128xf32>, vector<128x128xf32>, vector<128x128xf32> -> vector<128x128xf32>
    %24 = vector.broadcast %22 : vector<1x128xf32> to vector<128x128xf32>
    %25 = arith.addf %23, %24 : vector<128x128xf32>
    %c0_21 = arith.constant 0 : index
    %c0_22 = arith.constant 0 : index
    %26 = vector.load %arg4[%c0_21, %c0_22] : memref<128x128xf32, #tpu.memory_space<vmem>>, vector<128x128xf32>
    tpu.vector_store %arg4[%c0_21, %c0_22], %25 {strides = array<i32>} : memref<128x128xf32, #tpu.memory_space<vmem>>, vector<128x128xf32>,
    return
  }
  func.func @transform_0(%arg0: i32) -> (i32, i32) {
    %c0_i32 = arith.constant 0 : i32
    %c0_i32_0 = arith.constant 0 : i32
    return %arg0, %c0_i32 : i32, i32
  }
  func.func @transform_1(%arg0: i32) -> (i32, i32, i32) {
    %c0_i32 = arith.constant 0 : i32
    %c0_i32_0 = arith.constant 0 : i32
    %c0_i32_1 = arith.constant 0 : i32
    %c0_i32_2 = arith.constant 0 : i32
    return %c0_i32, %c0_i32_0, %c0_i32_1 : i32, i32, i32
  }
  func.func @transform_2(%arg0: i32) -> (i32, i32, i32) {
    %c0_i32 = arith.constant 0 : i32
    %c0_i32_0 = arith.constant 0 : i32
    %c0_i32_1 = arith.constant 0 : i32
    %c0_i32_2 = arith.constant 0 : i32
    return %c0_i32, %c0_i32_0, %c0_i32_1 : i32, i32, i32
  }
  func.func @transform_3(%arg0: i32) -> (i32, i32) {
    %c0_i32 = arith.constant 0 : i32
    %c0_i32_0 = arith.constant 0 : i32
    return %arg0, %c0_i32 : i32, i32
  }
}

</mosaic_0001>

<llo_original>
// kernel: tpu_custom_call.1
$region0: #{tpu_custom_call.1}
  #allocation0 [shape = 'u32[]', space=smem, size = 0x4, offset = 0x4, fixed_abs, tag = 'smem constant byte address 0x4 - core index']
  #allocation1 [shape = 'u32[144,128]{1,0:T(1,128)}', space=vmem, size = 0x12000, scoped, tag = 'internal scratch']
  %s0 = inlined_call_operand.hbm [shape: f32[256,256], index: 0, kind: input, shape index: {}]
  %s1 = inlined_call_operand.hbm [shape: f32[3,256,128], index: 1, kind: input, shape index: {}]
  %s2 = inlined_call_operand.vmem [shape: f32[3,1,128], index: 2, kind: input, shape index: {}]
  %s3 = inlined_call_operand.hbm [shape: f32[256,128], index: 3, kind: output, shape index: {}]
  %s4 = sld [smem:[#allocation0]]
  $region53: #{tpu_custom_call.1} parent=0
    _
  %s6 = ssub.s32 1, %s4
  %s7 = scalar_select 0, %s6, %s4
  $region1: #{tpu_custom_call.1} parent=0
    #allocation2 [shape = 'u8[262144]{0}', space=vmem, size = 0x40000, scoped, tag = 'input window, operand 0']
    #allocation3 [shape = 's32[2]{0}', space=sflag, size = 0x8, scoped, tag = 'scoped memory for tpu_custom_call.1']
    #allocation4 [shape = 's32[2]{0}', space=sflag, size = 0x8, scoped, tag = 'scoped memory for tpu_custom_call.1']
    #allocation5 [shape = 'u8[393216]{0}', space=vmem, size = 0x60000, scoped, tag = 'input window, operand 1, single buffered']
    #allocation6 [shape = 's32[1]{0}', space=sflag, size = 0x4, scoped, tag = 'scoped memory for tpu_custom_call.1']
    #allocation7 [shape = 'u8[131072]{0}', space=vmem, size = 0x20000, scoped, tag = 'output window, operand 0']
    %8 = vsyncpa [#allocation3], 0
    %s9 = scalar_lea.sflag [#allocation3], 1
    %10 = vsyncpa %s9, 0
    %11 = vsyncpa [#allocation6], 0
    %12 = vsyncpa [#allocation4], 0
    %s13 = scalar_lea.sflag [#allocation4], 1
    %14 = vsyncpa %s13, 0
    loop: start=0, step=1, limit=4
    $region2: #{tpu_custom_call.1} parent=1 // loop_pre_header
      _
    $region3: #{tpu_custom_call.1} parent=1 // loop_header
      %s16 = sphi 0, %s20
      %p17 = scmp.ge.s32.totalorder %s16, 4
      %s26 = sphi 0, %s28
      %s29 = sphi 0, %s26
      %s30 = sphi 0, %s29
      %s46 = sphi 0, %s30
      %s50 = sphi 0, %s50
      %s52 = sphi 0, %s50
      %s53 = sphi 0, %s52
      %s67 = sphi 0, %s53
      %s71 = sphi 0, %s71
      %s73 = sphi 0, %s71
      %s74 = sphi 0, %s73
      %s88 = sphi 0, %s74
      %s94 = sphi 0, %s96
      %s97 = sphi 0, %s94
      %s98 = sphi 0, %s97
      %s114 = sphi 0, %s98
    $region4: #{tpu_custom_call.1} parent=1 // loop_header_branch
      %19 = sbr.rel (%p17) target = $region8
    $region5: #{tpu_custom_call.1} parent=1 // loop_body
      %s21 = ssub.s32 %s16, 1
      %s22 = ssub.s32 %s16, 2
      %s23 = sadd.s32 %s16, 1
      %s24 = ssub.s32 %s16, %s23
      %p25 = scmp.eq.s32.totalorder %s24, 0
      %s27 = sadd.s32 %s26, 1
      %s28 = scalar_select %p25, %s26, %s27
      %p31 = pneg %p25
      %p32 = scmp.eq.s32.totalorder %s16, 1
      %p33 = por %p31, %p32
      %p34 = scmp.ne.s32.totalorder %s26, %s29
      %p35 = scmp.eq.s32.totalorder %s16, 0
      %p36 = por %p34, %p35
      %p37 = scmp.ne.s32.totalorder %s26, %s29
      %p38 = scmp.eq.s32.totalorder %s21, 1
      %p39 = por %p37, %p38
      %p40 = scmp.ne.s32.totalorder %s29, %s30
      %p41 = scmp.eq.s32.totalorder %s21, 0
      %p42 = por %p40, %p41
      %p43 = scmp.ne.s32.totalorder %s29, %s30
      %p44 = scmp.eq.s32.totalorder %s22, 1
      %p45 = por %p43, %p44
      %p47 = scmp.ne.s32.totalorder %s30, %s46
      %p48 = scmp.eq.s32.totalorder %s22, 0
      %p49 = por %p47, %p48
      %s51 = sadd.s32 %s50, 1
      %p54 = scmp.eq.s32.totalorder %s16, 1
      %p55 = scmp.ne.s32.totalorder %s50, %s52
      %p56 = scmp.eq.s32.totalorder %s16, 0
      %p57 = por %p55, %p56
      %p58 = scmp.ne.s32.totalorder %s50, %s52
      %p59 = scmp.eq.s32.totalorder %s21, 1
      %p60 = por %p58, %p59
      %p61 = scmp.ne.s32.totalorder %s52, %s53
      %p62 = scmp.eq.s32.totalorder %s21, 0
      %p63 = por %p61, %p62
      %p64 = scmp.ne.s32.totalorder %s52, %s53
      %p65 = scmp.eq.s32.totalorder %s22, 1
      %p66 = por %p64, %p65
      %p68 = scmp.ne.s32.totalorder %s53, %s67
      %p69 = scmp.eq.s32.totalorder %s22, 0
      %p70 = por %p68, %p69
      %s72 = sadd.s32 %s71, 1
      %p75 = scmp.eq.s32.totalorder %s16, 1
      %p76 = scmp.ne.s32.totalorder %s71, %s73
      %p77 = scmp.eq.s32.totalorder %s16, 0
      %p78 = por %p76, %p77
      %p79 = scmp.ne.s32.totalorder %s71, %s73
      %p80 = scmp.eq.s32.totalorder %s21, 1
      %p81 = por %p79, %p80
      %p82 = scmp.ne.s32.totalorder %s73, %s74
      %p83 = scmp.eq.s32.totalorder %s21, 0
      %p84 = por %p82, %p83
      %p85 = scmp.ne.s32.totalorder %s73, %s74
      %p86 = scmp.eq.s32.totalorder %s22, 1
      %p87 = por %p85, %p86
      %p89 = scmp.ne.s32.totalorder %s74, %s88
      %p90 = scmp.eq.s32.totalorder %s22, 0
      %p91 = por %p89, %p90
      %s92 = ssub.s32 %s16, %s23
      %p93 = scmp.eq.s32.totalorder %s92, 0
      %s95 = sadd.s32 %s94, 1
      %s96 = scalar_select %p93, %s94, %s95
      %p99 = pneg %p93
      %p100 = scmp.eq.s32.totalorder %s16, 1
      %p101 = por %p99, %p100
      %p102 = scmp.ne.s32.totalorder %s94, %s97
      %p103 = scmp.eq.s32.totalorder %s16, 0
      %p104 = por %p102, %p103
      %p105 = scmp.ne.s32.totalorder %s94, %s97
      %p106 = scmp.eq.s32.totalorder %s21, 1
      %p107 = por %p105, %p106
      %p108 = scmp.ne.s32.totalorder %s97, %s98
      %p109 = scmp.eq.s32.totalorder %s21, 0
      %p110 = por %p108, %p109
      %p111 = scmp.ne.s32.totalorder %s97, %s98
      %p112 = scmp.eq.s32.totalorder %s22, 1
      %p113 = por %p111, %p112
      %p115 = scmp.ne.s32.totalorder %s98, %s114
      %p116 = scmp.eq.s32.totalorder %s22, 0
      %p117 = por %p115, %p116
      %p118 = scmp.le.s32.totalorder 1, %s16
      %p119 = scmp.lt.s32.totalorder %s16, 3
      %p120 = pnand %p118, %p119
      %p121 = pneg %p120
      // Predicated region
      $region9: #{tpu_custom_call.1} parent=5 // pred_check
        _
      $region10: #{tpu_custom_call.1} parent=5 // pred_check_branch
        %123 = sbr.rel (%p120) target = $region12
      $region11: #{tpu_custom_call.1} parent=5 // pred_region
        %s124 = ssub.s32 %s16, 1
        // Predicated region
        $region13: #{tpu_custom_call.1} parent=11 // pred_check
          %p125 = pneg %p63
        $region14: #{tpu_custom_call.1} parent=11 // pred_check_branch
          %127 = sbr.rel (%p125) target = $region16
        $region15: #{tpu_custom_call.1} parent=11 // pred_region
          %s129 = ssub.s32 12288, 12288
          %130 = vsyncadd [#allocation6], %s129
          %s131 = sshll.u32 [#allocation5], 4
          %s132 = int_to_ptr.vmem [resolvable:$true] %s131
          %137 = dma.hbm_to_vmem [thread:$0]  %s1, 12288, %s132, [#allocation6], 128, 128, 8
        $region16: #{tpu_custom_call.1} parent=11 // pred_fallthru
          _
        // Predicated region
        $region17: #{tpu_custom_call.1} parent=11 // pred_check
          %p138 = pneg %p84
        $region18: #{tpu_custom_call.1} parent=11 // pred_check_branch
          %140 = sbr.rel (%p138) target = $region20
        $region19: #{tpu_custom_call.1} parent=11 // pred_region
          _
        $region20: #{tpu_custom_call.1} parent=11 // pred_fallthru
          _
      $region12: #{tpu_custom_call.1} parent=5 // pred_fallthru
        _
      %p141 = scmp.lt.s32.totalorder %s16, 2
      // Predicated region
      $region21: #{tpu_custom_call.1} parent=5 // pred_check
        %p142 = pneg %p141
      $region22: #{tpu_custom_call.1} parent=5 // pred_check_branch
        %144 = sbr.rel (%p142) target = $region24
      $region23: #{tpu_custom_call.1} parent=5 // pred_region
        // Predicated region
        $region25: #{tpu_custom_call.1} parent=23 // pred_check
          %p145 = pneg %p36
        $region26: #{tpu_custom_call.1} parent=23 // pred_check_branch
          %147 = sbr.rel (%p145) target = $region28
        $region27: #{tpu_custom_call.1} parent=23 // pred_region
          %s148 = sand.u32 %s26, 1
          %s149 = scalar_lea.sflag [#allocation3], %s148
          %s150 = sand.u32 %s26, 1
          %s151 = smul.addr %s150, 256
          %s152 = scalar_lea.vmem [#allocation2], %s151
          %s153 = smul.u32 16, %s16
          %s155 = ssub.s32 4096, 4096
          %156 = vsyncadd %s149, %s155
          %s157 = smul.addr %s153, 2
          %s158 = smul.addr %s157, 128
          %s159 = scalar_lea.hbm %s0, %s158
          %s160 = sshll.u32 %s152, 4
          %s161 = int_to_ptr.vmem [resolvable:$true] %s160
          %166 = dma.hbm_to_vmem [thread:$0]  %s159, 4096, %s161, %s149, 256, 256, 16
        $region28: #{tpu_custom_call.1} parent=23 // pred_fallthru
          _
      $region24: #{tpu_custom_call.1} parent=5 // pred_fallthru
        _
      %p167 = scmp.le.s32.totalorder 1, %s16
      %p168 = scmp.lt.s32.totalorder %s16, 3
      %p169 = pnand %p167, %p168
      %p170 = pneg %p169
      // Predicated region
      $region29: #{tpu_custom_call.1} parent=5 // pred_check
        _
      $region30: #{tpu_custom_call.1} parent=5 // pred_check_branch
        %172 = sbr.rel (%p169) target = $region32
      $region31: #{tpu_custom_call.1} parent=5 // pred_region
        %s173 = ssub.s32 %s16, 1
        %s174 = sand.u32 %s29, 1
        %s175 = scalar_lea.sflag [#allocation3], %s174
        %s176 = sand.u32 %s29, 1
        %s177 = smul.addr %s176, 256
        %s178 = scalar_lea.vmem [#allocation2], %s177
        // Predicated region
        $region33: #{tpu_custom_call.1} parent=31 // pred_check
          %p179 = pneg %p42
        $region34: #{tpu_custom_call.1} parent=31 // pred_check_branch
          %181 = sbr.rel (%p179) target = $region36
        $region35: #{tpu_custom_call.1} parent=31 // pred_region
          %182 = dma.done %s175, 4096
        $region36: #{tpu_custom_call.1} parent=31 // pred_fallthru
          _
        // Predicated region
        $region37: #{tpu_custom_call.1} parent=31 // pred_check
          %p183 = pneg %p63
        $region38: #{tpu_custom_call.1} parent=31 // pred_check_branch
          %185 = sbr.rel (%p183) target = $region40
        $region39: #{tpu_custom_call.1} parent=31 // pred_region
          %186 = dma.done [#allocation6], 12288
        $region40: #{tpu_custom_call.1} parent=31 // pred_fallthru
          _
        %s187 = sand.u32 %s29, 1
        %s188 = scalar_lea.sflag [#allocation3], %s187
        %s189 = sand.u32 %s29, 1
        %s190 = smul.addr %s189, 256
        %s191 = scalar_lea.vmem [#allocation2], %s190
        %p192 = pneg %p42
        %p193 = pneg %p39
        %p194 = pneg %p63
        %p195 = pneg %p60
        %p196 = pneg %p84
        %p197 = pneg %p81
        %p198 = pneg %p110
        %p199 = pneg %p107
        %s200 = sand.u32 %s97, 1
        %s201 = scalar_lea.sflag [#allocation4], %s200
        %s202 = sand.u32 %s97, 1
        %s203 = smul.addr %s202, 128
        %s204 = scalar_lea.vmem [#allocation7], %s203
        %s205 = smul.u32 16, %s21
        %s206 = smul.u32 16, %s21
        %v207 = vld [vmem:[%s178] sm:$0xff]
        %v208 = vld [vmem:[%s178 + $0x8] sm:$0xff]
        %v209 = vld [vmem:[%s178 + $0x10] sm:$0xff]
        %v210 = vld [vmem:[%s178 + $0x18] sm:$0xff]
        %v211 = vld [vmem:[%s178 + $0x20] sm:$0xff]
        %v212 = vld [vmem:[%s178 + $0x28] sm:$0xff]
        %v213 = vld [vmem:[%s178 + $0x30] sm:$0xff]
        %v214 = vld [vmem:[%s178 + $0x38] sm:$0xff]
        %v215 = vld [vmem:[%s178 + $0x40] sm:$0xff]
        %v216 = vld [vmem:[%s178 + $0x48] sm:$0xff]
        %v217 = vld [vmem:[%s178 + $0x50] sm:$0xff]
        %v218 = vld [vmem:[%s178 + $0x58] sm:$0xff]
        %v219 = vld [vmem:[%s178 + $0x60] sm:$0xff]
        %v220 = vld [vmem:[%s178 + $0x68] sm:$0xff]
        %v221 = vld [vmem:[%s178 + $0x70] sm:$0xff]
        %v222 = vld [vmem:[%s178 + $0x78] sm:$0xff]
        %v223 = vld [vmem:[%s178 + $0x80] sm:$0xff]
        %v224 = vld [vmem:[%s178 + $0x88] sm:$0xff]
        %v225 = vld [vmem:[%s178 + $0x90] sm:$0xff]
        %v226 = vld [vmem:[%s178 + $0x98] sm:$0xff]
        %v227 = vld [vmem:[%s178 + $0xa0] sm:$0xff]
        %v228 = vld [vmem:[%s178 + $0xa8] sm:$0xff]
        %v229 = vld [vmem:[%s178 + $0xb0] sm:$0xff]
        %v230 = vld [vmem:[%s178 + $0xb8] sm:$0xff]
        %v231 = vld [vmem:[%s178 + $0xc0] sm:$0xff]
        %v232 = vld [vmem:[%s178 + $0xc8] sm:$0xff]
        %v233 = vld [vmem:[%s178 + $0xd0] sm:$0xff]
        %v234 = vld [vmem:[%s178 + $0xd8] sm:$0xff]
        %v235 = vld [vmem:[%s178 + $0xe0] sm:$0xff]
        %v236 = vld [vmem:[%s178 + $0xe8] sm:$0xff]
        %v237 = vld [vmem:[%s178 + $0xf0] sm:$0xff]
        %v238 = vld [vmem:[%s178 + $0xf8] sm:$0xff]
        %v239 = vld [vmem:[#allocation5] sm:$0xff]
        %v240 = vld [vmem:[#allocation5 + $0x8] sm:$0xff]
        %v241 = vld [vmem:[#allocation5 + $0x10] sm:$0xff]
        %v242 = vld [vmem:[#allocation5 + $0x18] sm:$0xff]
        %v243 = vld [vmem:[#allocation5 + $0x20] sm:$0xff]
        %v244 = vld [vmem:[#allocation5 + $0x28] sm:$0xff]
        %v245 = vld [vmem:[#allocation5 + $0x30] sm:$0xff]
        %v246 = vld [vmem:[#allocation5 + $0x38] sm:$0xff]
        %v247 = vld [vmem:[#allocation5 + $0x40] sm:$0xff]
        %v248 = vld [vmem:[#allocation5 + $0x48] sm:$0xff]
        %v249 = vld [vmem:[#allocation5 + $0x50] sm:$0xff]
        %v250 = vld [vmem:[#allocation5 + $0x58] sm:$0xff]
        %v251 = vld [vmem:[#allocation5 + $0x60] sm:$0xff]
        %v252 = vld [vmem:[#allocation5 + $0x68] sm:$0xff]
        %v253 = vld [vmem:[#allocation5 + $0x70] sm:$0xff]
        %v254 = vld [vmem:[#allocation5 + $0x78] sm:$0xff]
        %v255 = vld [vmem:[#allocation5 + $0x80] sm:$0xff]
        %v256 = vld [vmem:[#allocation5 + $0x88] sm:$0xff]
        %v257 = vld [vmem:[#allocation5 + $0x90] sm:$0xff]
        %v258 = vld [vmem:[#allocation5 + $0x98] sm:$0xff]
        %v259 = vld [vmem:[#allocation5 + $0xa0] sm:$0xff]
        %v260 = vld [vmem:[#allocation5 + $0xa8] sm:$0xff]
        %v261 = vld [vmem:[#allocation5 + $0xb0] sm:$0xff]
        %v262 = vld [vmem:[#allocation5 + $0xb8] sm:$0xff]
        %v263 = vld [vmem:[#allocation5 + $0xc0] sm:$0xff]
        %v264 = vld [vmem:[#allocation5 + $0xc8] sm:$0xff]
        %v265 = vld [vmem:[#allocation5 + $0xd0] sm:$0xff]
        %v266 = vld [vmem:[#allocation5 + $0xd8] sm:$0xff]
        %v267 = vld [vmem:[#allocation5 + $0xe0] sm:$0xff]
        %v268 = vld [vmem:[#allocation5 + $0xe8] sm:$0xff]
        %v269 = vld [vmem:[#allocation5 + $0xf0] sm:$0xff]
        %v270 = vld [vmem:[#allocation5 + $0xf8] sm:$0xff]
        %v271 = vld [vmem:[%s2] sm:$0x1]
        %v273 = vlaneseq
        %v274 = vshrl.u32 %v273, 7
        %v275 = vsub.s32 0, %v274
        %v276 = vrot.slane %v271, %v275
        %278 = vmatprep.subr.mxu0 0.0
        %279 = vmatpush1.msra.mxu0 %v254
        %280 = vmatprep.subr.mxu0 0.0
        %281 = vmatpush1.msra.mxu0 %v253
        %282 = vmatprep.subr.mxu0 0.0
        %283 = vmatpush1.msra.mxu0 %v252
        %284 = vmatprep.subr.mxu0 0.0
        %285 = vmatpush1.msra.mxu0 %v251
        %286 = vmatprep.subr.mxu0 0.0
        %287 = vmatpush1.msra.mxu0 %v250
        %288 = vmatprep.subr.mxu0 0.0
        %289 = vmatpush1.msra.mxu0 %v249
        %290 = vmatprep.subr.mxu0 0.0
        %291 = vmatpush1.msra.mxu0 %v248
        %292 = vmatprep.subr.mxu0 0.0
        %293 = vmatpush1.msra.mxu0 %v247
        %294 = vmatprep.subr.mxu0 0.0
        %295 = vmatpush1.msra.mxu0 %v246
        %296 = vmatprep.subr.mxu0 0.0
        %297 = vmatpush1.msra.mxu0 %v245
        %298 = vmatprep.subr.mxu0 0.0
        %299 = vmatpush1.msra.mxu0 %v244
        %300 = vmatprep.subr.mxu0 0.0
        %301 = vmatpush1.msra.mxu0 %v243
        %302 = vmatprep.subr.mxu0 0.0
        %303 = vmatpush1.msra.mxu0 %v242
        %304 = vmatprep.subr.mxu0 0.0
        %305 = vmatpush1.msra.mxu0 %v241
        %306 = vmatprep.subr.mxu0 0.0
        %307 = vmatpush1.msra.mxu0 %v240
        %308 = vmatprep.subr.mxu0 0.0
        %309 = vmatpush1.msra.mxu0 %v239
        %310 = vmatprep.subr.mxu0 0.0
        %311 = vmatpush2.msra.mxu0 %v270
        %312 = vmatprep.subr.mxu0 0.0
        %313 = vmatpush2.msra.mxu0 %v269
        %314 = vmatprep.subr.mxu0 0.0
        %315 = vmatpush2.msra.mxu0 %v268
        %316 = vmatprep.subr.mxu0 0.0
        %317 = vmatpush2.msra.mxu0 %v267
        %318 = vmatprep.subr.mxu0 0.0
        %319 = vmatpush2.msra.mxu0 %v266
        %320 = vmatprep.subr.mxu0 0.0
        %321 = vmatpush2.msra.mxu0 %v265
        %322 = vmatprep.subr.mxu0 0.0
        %323 = vmatpush2.msra.mxu0 %v264
        %324 = vmatprep.subr.mxu0 0.0
        %325 = vmatpush2.msra.mxu0 %v263
        %326 = vmatprep.subr.mxu0 0.0
        %327 = vmatpush2.msra.mxu0 %v262
        %328 = vmatprep.subr.mxu0 0.0
        %329 = vmatpush2.msra.mxu0 %v261
        %330 = vmatprep.subr.mxu0 0.0
        %331 = vmatpush2.msra.mxu0 %v260
        %332 = vmatprep.subr.mxu0 0.0
        %333 = vmatpush2.msra.mxu0 %v259
        %334 = vmatprep.subr.mxu0 0.0
        %335 = vmatpush2.msra.mxu0 %v258
        %336 = vmatprep.subr.mxu0 0.0
        %337 = vmatpush2.msra.mxu0 %v257
        %338 = vmatprep.subr.mxu0 0.0
        %339 = vmatpush2.msra.mxu0 %v256
        %340 = vmatprep.subr.mxu0 0.0
        %341 = vmatpush2.msra.mxu0 %v255
        %342 = vmatprep.mubr.f32.mxu0 %v208
        %343 = vmatmul.mubr.f32.gmra.mxu0 %v207
        %v344 = vpop.f32.mrf.mxu0
        %v345 = vadd.f32 %v276, %v344
        %v346 = vpop.f32.mrf.mxu0
        %347 = vmatprep.mubr.f32.mxu0 %v210
        %348 = vmatmul.mubr.f32.gmra.mxu0 %v209
        %v349 = vpop.f32.mrf.mxu0
        %v350 = vadd.f32 %v276, %v349
        %v351 = vpop.f32.mrf.mxu0
        %352 = vmatprep.mubr.f32.mxu0 %v212
        %353 = vmatmul.mubr.f32.gmra.mxu0 %v211
        %v354 = vpop.f32.mrf.mxu0
        %v355 = vadd.f32 %v276, %v354
        %v356 = vpop.f32.mrf.mxu0
        %357 = vmatprep.mubr.f32.mxu0 %v214
        %358 = vmatmul.mubr.f32.gmra.mxu0 %v213
        %v359 = vpop.f32.mrf.mxu0
        %v360 = vadd.f32 %v276, %v359
        %v361 = vpop.f32.mrf.mxu0
        %362 = vmatprep.mubr.f32.mxu0 %v216
        %363 = vmatmul.mubr.f32.gmra.mxu0 %v215
        %v364 = vpop.f32.mrf.mxu0
        %v365 = vadd.f32 %v276, %v364
        %v366 = vpop.f32.mrf.mxu0
        %367 = vmatprep.mubr.f32.mxu0 %v218
        %368 = vmatmul.mubr.f32.gmra.mxu0 %v217
        %v369 = vpop.f32.mrf.mxu0
        %v370 = vadd.f32 %v276, %v369
        %v371 = vpop.f32.mrf.mxu0
        %372 = vmatprep.mubr.f32.mxu0 %v220
        %373 = vmatmul.mubr.f32.gmra.mxu0 %v219
        %v374 = vpop.f32.mrf.mxu0
        %v375 = vadd.f32 %v276, %v374
        %v376 = vpop.f32.mrf.mxu0
        %377 = vmatprep.mubr.f32.mxu0 %v222
        %378 = vmatmul.mubr.f32.gmra.mxu0 %v221
        %v379 = vpop.f32.mrf.mxu0
        %v380 = vadd.f32 %v276, %v379
        %v381 = vpop.f32.mrf.mxu0
        %382 = vmatprep.mubr.f32.mxu0 %v224
        %383 = vmatmul.mubr.f32.gmra.mxu0 %v223
        %v384 = vpop.f32.mrf.mxu0
        %v385 = vadd.f32 %v276, %v384
        %v386 = vpop.f32.mrf.mxu0
        %387 = vmatprep.mubr.f32.mxu0 %v226
        %388 = vmatmul.mubr.f32.gmra.mxu0 %v225
        %v389 = vpop.f32.mrf.mxu0
        %v390 = vadd.f32 %v276, %v389
        %v391 = vpop.f32.mrf.mxu0
        %392 = vmatprep.mubr.f32.mxu0 %v228
        %393 = vmatmul.mubr.f32.gmra.mxu0 %v227
        %v394 = vpop.f32.mrf.mxu0
        %v395 = vadd.f32 %v276, %v394
        %v396 = vpop.f32.mrf.mxu0
        %397 = vmatprep.mubr.f32.mxu0 %v230
        %398 = vmatmul.mubr.f32.gmra.mxu0 %v229
        %v399 = vpop.f32.mrf.mxu0
        %v400 = vadd.f32 %v276, %v399
        %v401 = vpop.f32.mrf.mxu0
        %402 = vmatprep.mubr.f32.mxu0 %v232
        %403 = vmatmul.mubr.f32.gmra.mxu0 %v231
        %v404 = vpop.f32.mrf.mxu0
        %v405 = vadd.f32 %v276, %v404
        %v406 = vpop.f32.mrf.mxu0
        %407 = vmatprep.mubr.f32.mxu0 %v234
        %408 = vmatmul.mubr.f32.gmra.mxu0 %v233
        %v409 = vpop.f32.mrf.mxu0
        %v410 = vadd.f32 %v276, %v409
        %v411 = vpop.f32.mrf.mxu0
        %412 = vmatprep.mubr.f32.mxu0 %v236
        %413 = vmatmul.mubr.f32.gmra.mxu0 %v235
        %v414 = vpop.f32.mrf.mxu0
        %v415 = vadd.f32 %v276, %v414
        %v416 = vpop.f32.mrf.mxu0
        %417 = vmatprep.mubr.f32.mxu0 %v238
        %418 = vmatmul.mubr.f32.gmra.mxu0 %v237
        %v419 = vpop.f32.mrf.mxu0
        %v420 = vadd.f32 %v276, %v419
        %v421 = vpop.f32.mrf.mxu0
        %422 = vdwg.mxu0
        %v423 = vmax.f32 %v345, 0.0
        %v424 = vmax.f32 %v350, 0.0
        %v425 = vmax.f32 %v355, 0.0
        %v426 = vmax.f32 %v360, 0.0
        %v427 = vmax.f32 %v365, 0.0
        %v428 = vmax.f32 %v370, 0.0
        %v429 = vmax.f32 %v375, 0.0
        %v430 = vmax.f32 %v380, 0.0
        %v431 = vmax.f32 %v385, 0.0
        %v432 = vmax.f32 %v390, 0.0
        %v433 = vmax.f32 %v395, 0.0
        %v434 = vmax.f32 %v400, 0.0
        %v435 = vmax.f32 %v405, 0.0
        %v436 = vmax.f32 %v410, 0.0
        %v437 = vmax.f32 %v415, 0.0
        %v438 = vmax.f32 %v420, 0.0
        %s439 = scalar_lea.vmem [#allocation5], 256
        %v440 = vld [vmem:[%s439] sm:$0xff]
        %v441 = vld [vmem:[%s439 + $0x8] sm:$0xff]
        %v442 = vld [vmem:[%s439 + $0x10] sm:$0xff]
        %v443 = vld [vmem:[%s439 + $0x18] sm:$0xff]
        %v444 = vld [vmem:[%s439 + $0x20] sm:$0xff]
        %v445 = vld [vmem:[%s439 + $0x28] sm:$0xff]
        %v446 = vld [vmem:[%s439 + $0x30] sm:$0xff]
        %v447 = vld [vmem:[%s439 + $0x38] sm:$0xff]
        %v448 = vld [vmem:[%s439 + $0x40] sm:$0xff]
        %v449 = vld [vmem:[%s439 + $0x48] sm:$0xff]
        %v450 = vld [vmem:[%s439 + $0x50] sm:$0xff]
        %v451 = vld [vmem:[%s439 + $0x58] sm:$0xff]
        %v452 = vld [vmem:[%s439 + $0x60] sm:$0xff]
        %v453 = vld [vmem:[%s439 + $0x68] sm:$0xff]
        %v454 = vld [vmem:[%s439 + $0x70] sm:$0xff]
        %v455 = vld [vmem:[%s439 + $0x78] sm:$0xff]
        %s456 = scalar_lea.vmem %s2, 1
        %v457 = vld [vmem:[%s456] sm:$0x1]
        %v459 = vlaneseq
        %v460 = vshrl.u32 %v459, 7
        %v461 = vsub.s32 0, %v460
        %v462 = vrot.slane %v457, %v461
        %464 = vmatprep.subr.mxu0 0.0
        %465 = vmatpush1.msra.mxu0 %v455
        %466 = vmatprep.subr.mxu0 0.0
        %467 = vmatpush1.msra.mxu0 %v454
        %468 = vmatprep.subr.mxu0 0.0
        %469 = vmatpush1.msra.mxu0 %v453
        %470 = vmatprep.subr.mxu0 0.0
        %471 = vmatpush1.msra.mxu0 %v452
        %472 = vmatprep.subr.mxu0 0.0
        %473 = vmatpush1.msra.mxu0 %v451
        %474 = vmatprep.subr.mxu0 0.0
        %475 = vmatpush1.msra.mxu0 %v450
        %476 = vmatprep.subr.mxu0 0.0
        %477 = vmatpush1.msra.mxu0 %v449
        %478 = vmatprep.subr.mxu0 0.0
        %479 = vmatpush1.msra.mxu0 %v448
        %480 = vmatprep.subr.mxu0 0.0
        %481 = vmatpush1.msra.mxu0 %v447
        %482 = vmatprep.subr.mxu0 0.0
        %483 = vmatpush1.msra.mxu0 %v446
        %484 = vmatprep.subr.mxu0 0.0
        %485 = vmatpush1.msra.mxu0 %v445
        %486 = vmatprep.subr.mxu0 0.0
        %487 = vmatpush1.msra.mxu0 %v444
        %488 = vmatprep.subr.mxu0 0.0
        %489 = vmatpush1.msra.mxu0 %v443
        %490 = vmatprep.subr.mxu0 0.0
        %491 = vmatpush1.msra.mxu0 %v442
        %492 = vmatprep.subr.mxu0 0.0
        %493 = vmatpush1.msra.mxu0 %v441
        %494 = vmatprep.subr.mxu0 0.0
        %495 = vmatpush1.msra.mxu0 %v440
        %496 = vmatprep.subr.mxu0 0.0
        %497 = vmatpush2.msra.mxu0 0.0
        %498 = vmatprep.subr.mxu0 0.0
        %499 = vmatpush2.msra.mxu0 0.0
        %500 = vmatprep.subr.mxu0 0.0
        %501 = vmatpush2.msra.mxu0 0.0
        %502 = vmatprep.subr.mxu0 0.0
        %503 = vmatpush2.msra.mxu0 0.0
        %504 = vmatprep.subr.mxu0 0.0
        %505 = vmatpush2.msra.mxu0 0.0
        %506 = vmatprep.subr.mxu0 0.0
        %507 = vmatpush2.msra.mxu0 0.0
        %508 = vmatprep.subr.mxu0 0.0
        %509 = vmatpush2.msra.mxu0 0.0
        %510 = vmatprep.subr.mxu0 0.0
        %511 = vmatpush2.msra.mxu0 0.0
        %512 = vmatprep.subr.mxu0 0.0
        %513 = vmatpush2.msra.mxu0 0.0
        %514 = vmatprep.subr.mxu0 0.0
        %515 = vmatpush2.msra.mxu0 0.0
        %516 = vmatprep.subr.mxu0 0.0
        %517 = vmatpush2.msra.mxu0 0.0
        %518 = vmatprep.subr.mxu0 0.0
        %519 = vmatpush2.msra.mxu0 0.0
        %520 = vmatprep.subr.mxu0 0.0
        %521 = vmatpush2.msra.mxu0 0.0
        %522 = vmatprep.subr.mxu0 0.0
        %523 = vmatpush2.msra.mxu0 0.0
        %524 = vmatprep.subr.mxu0 0.0
        %525 = vmatpush2.msra.mxu0 0.0
        %526 = vmatprep.subr.mxu0 0.0
        %527 = vmatpush2.msra.mxu0 0.0
        %528 = vmatprep.mubr.f32.mxu0 0.0
        %529 = vmatmul.mubr.f32.gmra.mxu0 %v423
        %v530 = vpop.f32.mrf.mxu0
        %v531 = vadd.f32 %v462, %v530
        %v532 = vpop.f32.mrf.mxu0
        %533 = vmatprep.mubr.f32.mxu0 0.0
        %534 = vmatmul.mubr.f32.gmra.mxu0 %v424
        %v535 = vpop.f32.mrf.mxu0
        %v536 = vadd.f32 %v462, %v535
        %v537 = vpop.f32.mrf.mxu0
        %538 = vmatprep.mubr.f32.mxu0 0.0
        %539 = vmatmul.mubr.f32.gmra.mxu0 %v425
        %v540 = vpop.f32.mrf.mxu0
        %v541 = vadd.f32 %v462, %v540
        %v542 = vpop.f32.mrf.mxu0
        %543 = vmatprep.mubr.f32.mxu0 0.0
        %544 = vmatmul.mubr.f32.gmra.mxu0 %v426
        %v545 = vpop.f32.mrf.mxu0
        %v546 = vadd.f32 %v462, %v545
        %v547 = vpop.f32.mrf.mxu0
        %548 = vmatprep.mubr.f32.mxu0 0.0
        %549 = vmatmul.mubr.f32.gmra.mxu0 %v427
        %v550 = vpop.f32.mrf.mxu0
        %v551 = vadd.f32 %v462, %v550
        %v552 = vpop.f32.mrf.mxu0
        %553 = vmatprep.mubr.f32.mxu0 0.0
        %554 = vmatmul.mubr.f32.gmra.mxu0 %v428
        %v555 = vpop.f32.mrf.mxu0
        %v556 = vadd.f32 %v462, %v555
        %v557 = vpop.f32.mrf.mxu0
        %558 = vmatprep.mubr.f32.mxu0 0.0
        %559 = vmatmul.mubr.f32.gmra.mxu0 %v429
        %v560 = vpop.f32.mrf.mxu0
        %v561 = vadd.f32 %v462, %v560
        %v562 = vpop.f32.mrf.mxu0
        %563 = vmatprep.mubr.f32.mxu0 0.0
        %564 = vmatmul.mubr.f32.gmra.mxu0 %v430
        %v565 = vpop.f32.mrf.mxu0
        %v566 = vadd.f32 %v462, %v565
        %v567 = vpop.f32.mrf.mxu0
        %568 = vmatprep.mubr.f32.mxu0 0.0
        %569 = vmatmul.mubr.f32.gmra.mxu0 %v431
        %v570 = vpop.f32.mrf.mxu0
        %v571 = vadd.f32 %v462, %v570
        %v572 = vpop.f32.mrf.mxu0
        %573 = vmatprep.mubr.f32.mxu0 0.0
        %574 = vmatmul.mubr.f32.gmra.mxu0 %v432
        %v575 = vpop.f32.mrf.mxu0
        %v576 = vadd.f32 %v462, %v575
        %v577 = vpop.f32.mrf.mxu0
        %578 = vmatprep.mubr.f32.mxu0 0.0
        %579 = vmatmul.mubr.f32.gmra.mxu0 %v433
        %v580 = vpop.f32.mrf.mxu0
        %v581 = vadd.f32 %v462, %v580
        %v582 = vpop.f32.mrf.mxu0
        %583 = vmatprep.mubr.f32.mxu0 0.0
        %584 = vmatmul.mubr.f32.gmra.mxu0 %v434
        %v585 = vpop.f32.mrf.mxu0
        %v586 = vadd.f32 %v462, %v585
        %v587 = vpop.f32.mrf.mxu0
        %588 = vmatprep.mubr.f32.mxu0 0.0
        %589 = vmatmul.mubr.f32.gmra.mxu0 %v435
        %v590 = vpop.f32.mrf.mxu0
        %v591 = vadd.f32 %v462, %v590
        %v592 = vpop.f32.mrf.mxu0
        %593 = vmatprep.mubr.f32.mxu0 0.0
        %594 = vmatmul.mubr.f32.gmra.mxu0 %v436
        %v595 = vpop.f32.mrf.mxu0
        %v596 = vadd.f32 %v462, %v595
        %v597 = vpop.f32.mrf.mxu0
        %598 = vmatprep.mubr.f32.mxu0 0.0
        %599 = vmatmul.mubr.f32.gmra.mxu0 %v437
        %v600 = vpop.f32.mrf.mxu0
        %v601 = vadd.f32 %v462, %v600
        %v602 = vpop.f32.mrf.mxu0
        %603 = vmatprep.mubr.f32.mxu0 0.0
        %604 = vmatmul.mubr.f32.gmra.mxu0 %v438
        %v605 = vpop.f32.mrf.mxu0
        %v606 = vadd.f32 %v462, %v605
        %v607 = vpop.f32.mrf.mxu0
        %608 = vdwg.mxu0
        %v609 = vmax.f32 %v531, 0.0
        %v610 = vmax.f32 %v536, 0.0
        %v611 = vmax.f32 %v541, 0.0
        %v612 = vmax.f32 %v546, 0.0
        %v613 = vmax.f32 %v551, 0.0
        %v614 = vmax.f32 %v556, 0.0
        %v615 = vmax.f32 %v561, 0.0
        %v616 = vmax.f32 %v566, 0.0
        %v617 = vmax.f32 %v571, 0.0
        %v618 = vmax.f32 %v576, 0.0
        %v619 = vmax.f32 %v581, 0.0
        %v620 = vmax.f32 %v586, 0.0
        %v621 = vmax.f32 %v591, 0.0
        %v622 = vmax.f32 %v596, 0.0
        %v623 = vmax.f32 %v601, 0.0
        %v624 = vmax.f32 %v606, 0.0
        %s625 = scalar_lea.vmem [#allocation5], 512
        %v626 = vld [vmem:[%s625] sm:$0xff]
        %v627 = vld [vmem:[%s625 + $0x8] sm:$0xff]
        %v628 = vld [vmem:[%s625 + $0x10] sm:$0xff]
        %v629 = vld [vmem:[%s625 + $0x18] sm:$0xff]
        %v630 = vld [vmem:[%s625 + $0x20] sm:$0xff]
        %v631 = vld [vmem:[%s625 + $0x28] sm:$0xff]
        %v632 = vld [vmem:[%s625 + $0x30] sm:$0xff]
        %v633 = vld [vmem:[%s625 + $0x38] sm:$0xff]
        %v634 = vld [vmem:[%s625 + $0x40] sm:$0xff]
        %v635 = vld [vmem:[%s625 + $0x48] sm:$0xff]
        %v636 = vld [vmem:[%s625 + $0x50] sm:$0xff]
        %v637 = vld [vmem:[%s625 + $0x58] sm:$0xff]
        %v638 = vld [vmem:[%s625 + $0x60] sm:$0xff]
        %v639 = vld [vmem:[%s625 + $0x68] sm:$0xff]
        %v640 = vld [vmem:[%s625 + $0x70] sm:$0xff]
        %v641 = vld [vmem:[%s625 + $0x78] sm:$0xff]
        %s642 = scalar_lea.vmem %s2, 2
        %v643 = vld [vmem:[%s642] sm:$0x1]
        %v645 = vlaneseq
        %v646 = vshrl.u32 %v645, 7
        %v647 = vsub.s32 0, %v646
        %v648 = vrot.slane %v643, %v647
        %650 = vmatprep.subr.mxu0 0.0
        %651 = vmatpush1.msra.mxu0 %v641
        %652 = vmatprep.subr.mxu0 0.0
        %653 = vmatpush1.msra.mxu0 %v640
        %654 = vmatprep.subr.mxu0 0.0
        %655 = vmatpush1.msra.mxu0 %v639
        %656 = vmatprep.subr.mxu0 0.0
        %657 = vmatpush1.msra.mxu0 %v638
        %658 = vmatprep.subr.mxu0 0.0
        %659 = vmatpush1.msra.mxu0 %v637
        %660 = vmatprep.subr.mxu0 0.0
        %661 = vmatpush1.msra.mxu0 %v636
        %662 = vmatprep.subr.mxu0 0.0
        %663 = vmatpush1.msra.mxu0 %v635
        %664 = vmatprep.subr.mxu0 0.0
        %665 = vmatpush1.msra.mxu0 %v634
        %666 = vmatprep.subr.mxu0 0.0
        %667 = vmatpush1.msra.mxu0 %v633
        %668 = vmatprep.subr.mxu0 0.0
        %669 = vmatpush1.msra.mxu0 %v632
        %670 = vmatprep.subr.mxu0 0.0
        %671 = vmatpush1.msra.mxu0 %v631
        %672 = vmatprep.subr.mxu0 0.0
        %673 = vmatpush1.msra.mxu0 %v630
        %674 = vmatprep.subr.mxu0 0.0
        %675 = vmatpush1.msra.mxu0 %v629
        %676 = vmatprep.subr.mxu0 0.0
        %677 = vmatpush1.msra.mxu0 %v628
        %678 = vmatprep.subr.mxu0 0.0
        %679 = vmatpush1.msra.mxu0 %v627
        %680 = vmatprep.subr.mxu0 0.0
        %681 = vmatpush1.msra.mxu0 %v626
        %682 = vmatprep.subr.mxu0 0.0
        %683 = vmatpush2.msra.mxu0 0.0
        %684 = vmatprep.subr.mxu0 0.0
        %685 = vmatpush2.msra.mxu0 0.0
        %686 = vmatprep.subr.mxu0 0.0
        %687 = vmatpush2.msra.mxu0 0.0
        %688 = vmatprep.subr.mxu0 0.0
        %689 = vmatpush2.msra.mxu0 0.0
        %690 = vmatprep.subr.mxu0 0.0
        %691 = vmatpush2.msra.mxu0 0.0
        %692 = vmatprep.subr.mxu0 0.0
        %693 = vmatpush2.msra.mxu0 0.0
        %694 = vmatprep.subr.mxu0 0.0
        %695 = vmatpush2.msra.mxu0 0.0
        %696 = vmatprep.subr.mxu0 0.0
        %697 = vmatpush2.msra.mxu0 0.0
        %698 = vmatprep.subr.mxu0 0.0
        %699 = vmatpush2.msra.mxu0 0.0
        %700 = vmatprep.subr.mxu0 0.0
        %701 = vmatpush2.msra.mxu0 0.0
        %702 = vmatprep.subr.mxu0 0.0
        %703 = vmatpush2.msra.mxu0 0.0
        %704 = vmatprep.subr.mxu0 0.0
        %705 = vmatpush2.msra.mxu0 0.0
        %706 = vmatprep.subr.mxu0 0.0
        %707 = vmatpush2.msra.mxu0 0.0
        %708 = vmatprep.subr.mxu0 0.0
        %709 = vmatpush2.msra.mxu0 0.0
        %710 = vmatprep.subr.mxu0 0.0
        %711 = vmatpush2.msra.mxu0 0.0
        %712 = vmatprep.subr.mxu0 0.0
        %713 = vmatpush2.msra.mxu0 0.0
        %714 = vmatprep.mubr.f32.mxu0 0.0
        %715 = vmatmul.mubr.f32.gmra.mxu0 %v609
        %v716 = vpop.f32.mrf.mxu0
        %v717 = vadd.f32 %v648, %v716
        %v718 = vpop.f32.mrf.mxu0
        %719 = vmatprep.mubr.f32.mxu0 0.0
        %720 = vmatmul.mubr.f32.gmra.mxu0 %v610
        %v721 = vpop.f32.mrf.mxu0
        %v722 = vadd.f32 %v648, %v721
        %v723 = vpop.f32.mrf.mxu0
        %724 = vmatprep.mubr.f32.mxu0 0.0
        %725 = vmatmul.mubr.f32.gmra.mxu0 %v611
        %v726 = vpop.f32.mrf.mxu0
        %v727 = vadd.f32 %v648, %v726
        %v728 = vpop.f32.mrf.mxu0
        %729 = vmatprep.mubr.f32.mxu0 0.0
        %730 = vmatmul.mubr.f32.gmra.mxu0 %v612
        %v731 = vpop.f32.mrf.mxu0
        %v732 = vadd.f32 %v648, %v731
        %v733 = vpop.f32.mrf.mxu0
        %734 = vmatprep.mubr.f32.mxu0 0.0
        %735 = vmatmul.mubr.f32.gmra.mxu0 %v613
        %v736 = vpop.f32.mrf.mxu0
        %v737 = vadd.f32 %v648, %v736
        %v738 = vpop.f32.mrf.mxu0
        %739 = vmatprep.mubr.f32.mxu0 0.0
        %740 = vmatmul.mubr.f32.gmra.mxu0 %v614
        %v741 = vpop.f32.mrf.mxu0
        %v742 = vadd.f32 %v648, %v741
        %v743 = vpop.f32.mrf.mxu0
        %744 = vmatprep.mubr.f32.mxu0 0.0
        %745 = vmatmul.mubr.f32.gmra.mxu0 %v615
        %v746 = vpop.f32.mrf.mxu0
        %v747 = vadd.f32 %v648, %v746
        %v748 = vpop.f32.mrf.mxu0
        %749 = vmatprep.mubr.f32.mxu0 0.0
        %750 = vmatmul.mubr.f32.gmra.mxu0 %v616
        %v751 = vpop.f32.mrf.mxu0
        %v752 = vadd.f32 %v648, %v751
        %v753 = vpop.f32.mrf.mxu0
        %754 = vmatprep.mubr.f32.mxu0 0.0
        %755 = vmatmul.mubr.f32.gmra.mxu0 %v617
        %v756 = vpop.f32.mrf.mxu0
        %v757 = vadd.f32 %v648, %v756
        %v758 = vpop.f32.mrf.mxu0
        %759 = vmatprep.mubr.f32.mxu0 0.0
        %760 = vmatmul.mubr.f32.gmra.mxu0 %v618
        %v761 = vpop.f32.mrf.mxu0
        %v762 = vadd.f32 %v648, %v761
        %v763 = vpop.f32.mrf.mxu0
        %764 = vmatprep.mubr.f32.mxu0 0.0
        %765 = vmatmul.mubr.f32.gmra.mxu0 %v619
        %v766 = vpop.f32.mrf.mxu0
        %v767 = vadd.f32 %v648, %v766
        %v768 = vpop.f32.mrf.mxu0
        %769 = vmatprep.mubr.f32.mxu0 0.0
        %770 = vmatmul.mubr.f32.gmra.mxu0 %v620
        %v771 = vpop.f32.mrf.mxu0
        %v772 = vadd.f32 %v648, %v771
        %v773 = vpop.f32.mrf.mxu0
        %774 = vmatprep.mubr.f32.mxu0 0.0
        %775 = vmatmul.mubr.f32.gmra.mxu0 %v621
        %v776 = vpop.f32.mrf.mxu0
        %v777 = vadd.f32 %v648, %v776
        %v778 = vpop.f32.mrf.mxu0
        %779 = vmatprep.mubr.f32.mxu0 0.0
        %780 = vmatmul.mubr.f32.gmra.mxu0 %v622
        %v781 = vpop.f32.mrf.mxu0
        %v782 = vadd.f32 %v648, %v781
        %v783 = vpop.f32.mrf.mxu0
        %784 = vmatprep.mubr.f32.mxu0 0.0
        %785 = vmatmul.mubr.f32.gmra.mxu0 %v623
        %v786 = vpop.f32.mrf.mxu0
        %v787 = vadd.f32 %v648, %v786
        %v788 = vpop.f32.mrf.mxu0
        %789 = vmatprep.mubr.f32.mxu0 0.0
        %790 = vmatmul.mubr.f32.gmra.mxu0 %v624
        %v791 = vpop.f32.mrf.mxu0
        %v792 = vadd.f32 %v648, %v791
        %v793 = vpop.f32.mrf.mxu0
        %794 = vdwg.mxu0
        %795 = vst [vmem:[%s204] sm:$0xff] %v717
        %796 = vst [vmem:[%s204 + $0x8] sm:$0xff] %v722
        %797 = vst [vmem:[%s204 + $0x10] sm:$0xff] %v727
        %798 = vst [vmem:[%s204 + $0x18] sm:$0xff] %v732
        %799 = vst [vmem:[%s204 + $0x20] sm:$0xff] %v737
        %800 = vst [vmem:[%s204 + $0x28] sm:$0xff] %v742
        %801 = vst [vmem:[%s204 + $0x30] sm:$0xff] %v747
        %802 = vst [vmem:[%s204 + $0x38] sm:$0xff] %v752
        %803 = vst [vmem:[%s204 + $0x40] sm:$0xff] %v757
        %804 = vst [vmem:[%s204 + $0x48] sm:$0xff] %v762
        %805 = vst [vmem:[%s204 + $0x50] sm:$0xff] %v767
        %806 = vst [vmem:[%s204 + $0x58] sm:$0xff] %v772
        %807 = vst [vmem:[%s204 + $0x60] sm:$0xff] %v777
        %808 = vst [vmem:[%s204 + $0x68] sm:$0xff] %v782
        %809 = vst [vmem:[%s204 + $0x70] sm:$0xff] %v787
        %810 = vst [vmem:[%s204 + $0x78] sm:$0xff] %v792
        %s811 = sand.u32 %s97, 1
        %s812 = scalar_lea.sflag [#allocation4], %s811
        %s813 = sand.u32 %s97, 1
        %s814 = smul.addr %s813, 128
        %s815 = scalar_lea.vmem [#allocation7], %s814
        // Predicated region
        $region41: #{tpu_custom_call.1} parent=31 // pred_check
          %p816 = pneg %p107
        $region42: #{tpu_custom_call.1} parent=31 // pred_check_branch
          %818 = sbr.rel (%p816) target = $region44
        $region43: #{tpu_custom_call.1} parent=31 // pred_region
          %s819 = smul.u32 16, %s21
          %s821 = ssub.s32 2048, 2048
          %822 = vsyncadd %s812, %s821
          %s823 = smul.addr %s819, 128
          %s824 = scalar_lea.hbm %s3, %s823
          %s825 = sshll.u32 %s815, 4
          %s826 = int_to_ptr.vmem [resolvable:$true] %s825
          %831 = dma.vmem_to_hbm [thread:$0]  %s826, 2048, %s824, %s812, 128, 128, 8
        $region44: #{tpu_custom_call.1} parent=31 // pred_fallthru
          _
      $region32: #{tpu_custom_call.1} parent=5 // pred_fallthru
        _
      %p832 = scmp.le.s32.totalorder 2, %s16
      // Predicated region
      $region45: #{tpu_custom_call.1} parent=5 // pred_check
        %p833 = pneg %p832
      $region46: #{tpu_custom_call.1} parent=5 // pred_check_branch
        %835 = sbr.rel (%p833) target = $region48
      $region47: #{tpu_custom_call.1} parent=5 // pred_region
        %s836 = ssub.s32 %s16, 2
        // Predicated region
        $region49: #{tpu_custom_call.1} parent=47 // pred_check
          %p837 = pneg %p113
        $region50: #{tpu_custom_call.1} parent=47 // pred_check_branch
          %839 = sbr.rel (%p837) target = $region52
        $region51: #{tpu_custom_call.1} parent=47 // pred_region
          %s840 = sand.u32 %s98, 1
          %s841 = scalar_lea.sflag [#allocation4], %s840
          %s842 = sand.u32 %s98, 1
          %s843 = smul.addr %s842, 128
          %s844 = scalar_lea.vmem [#allocation7], %s843
          %845 = dma.done %s841, 2048
        $region52: #{tpu_custom_call.1} parent=47 // pred_fallthru
          _
      $region48: #{tpu_custom_call.1} parent=5 // pred_fallthru
        _
    $region6: #{tpu_custom_call.1} parent=1 // loop_footer
      %s20 = sadd.s32 1, %s16
    $region7: #{tpu_custom_call.1} parent=1 // loop_footer_branch
      %15 = sbr.rel target = $region3
    $region8: #{tpu_custom_call.1} parent=1 // loop_exit
      _
    %846 = vsyncpa [#allocation3], 1
    %s847 = scalar_lea.sflag [#allocation3], 1
    %848 = vsyncpa %s847, 1
    %849 = vsyncpa [#allocation6], 1
    %850 = vsyncpa [#allocation4], 1
    %s851 = scalar_lea.sflag [#allocation4], 1
    %852 = vsyncpa %s851, 1

</llo_original>
